<compile_context>
chip_gen: v6e
topology: v6e:2x2x1
jax: 0.10.0
libtpu: 0.0.40
codegen_flags: <defaults>
</compile_context>

<pallas_src>
import functools

import jax
import jax.numpy as jnp
from jax.experimental import pallas as pl
from jax.experimental.pallas import tpu as pltpu

_LANE = 128      # vreg lane width
_SUBLANE = 8     # vreg sublane width


def _round_up(x: int, m: int) -> int:
    return (x + m - 1) // m * m


def _pad_feature_dim(d: int) -> int:
    # 256-granular padding for large dims (2x256x256 MXU on v6e/v7x),
    # 128 for small dims (v5e MXU width / lane width).
    g = 256 if d >= 256 else _LANE
    return _round_up(d, g)


def _vmem_capacity_bytes() -> int:
    try:
        info = pltpu.get_tpu_info()
        cap = getattr(info, "vmem_capacity_bytes", None)
        if cap:
            return int(cap)
    except Exception:
        pass
    return 64 * 1024 * 1024  # conservative default (v7x per-TensorCore)


def _largest_tile(d: int, cands=(512, 256, 128, 64, 32, 16, 8)) -> int:
    for t in cands:
        if d % t == 0:
            return t
    return d


# ----------------------------------------------------------------------------
# One-time parameter preparation (pad + cast).  Reused for every forward call.
# ----------------------------------------------------------------------------
def prepare_mlp_params(params, compute_dtype=jnp.bfloat16):
    """params: list of (w: (d_in, d_out), b: (d_out,), apply_relu: bool)."""
    dims = [params[0][0].shape[0]] + [w.shape[1] for (w, _, _) in params]
    pads = [_pad_feature_dim(d) for d in dims]
    prepared = []
    for l, (w, b, relu) in enumerate(params):
        d_in, d_out = w.shape
        w_p = jnp.pad(w.astype(jnp.float32),
                      ((0, pads[l] - d_in), (0, pads[l + 1] - d_out)))
        b_p = jnp.pad(b.astype(jnp.float32), (0, pads[l + 1] - d_out))
        prepared.append(dict(
            w=w_p.astype(compute_dtype),            # MXU input dtype
            b=b_p.reshape(1, pads[l + 1]),          # bias stays f32
            relu=bool(relu),
            d_in=d_in, d_out=d_out,
            d_in_pad=pads[l], d_out_pad=pads[l + 1]))
    return prepared


# ----------------------------------------------------------------------------
# Fused kernel: whole MLP on one batch tile.
# refs = (x_ref, w0, b0, w1, b1, ..., o_ref).  Activation stays in vregs/VMEM
# between layers (static Python loop -> fully unrolled, MXU back-to-back).
# ----------------------------------------------------------------------------
def _fused_mlp_kernel(*refs, relu_flags):
    x_ref = refs[0]
    o_ref = refs[-1]
    h = x_ref[...].astype(jnp.float32)                    # (tm, in_pad) f32
    for l, relu in enumerate(relu_flags):
        wv = refs[1 + 2 * l][...]                         # (d_in_pad, d_out_pad)
        bv = refs[2 + 2 * l][...]                         # (1, d_out_pad) f32
        # bf16 matmul inputs, f32 accumulation on the MXU; epilogue in f32.
        h = jnp.dot(h.astype(wv.dtype), wv,
                    preferred_element_type=jnp.float32) + bv
        if relu:
            h = jnp.maximum(h, 0.0)
    o_ref[...] = h.astype(o_ref.dtype)


def _fused_call(x_p, prepared, tm, out_dtype, single_buffer_weights,
                vmem_limit, cost):
    B_pad, in_pad = x_p.shape
    out_pad = prepared[-1]["d_out_pad"]
    n_tiles = B_pad // tm
    wkw = dict(pipeline_mode=pl.Buffered(1)) if single_buffer_weights else {}

    flat_inputs = [x_p]
    in_specs = [pl.BlockSpec((tm, in_pad), lambda i: (i, 0))]
    relu_flags = []
    for p in prepared:
        flat_inputs += [p["w"], p["b"]]
        in_specs += [
            pl.BlockSpec((p["d_in_pad"], p["d_out_pad"]), lambda i: (0, 0), **wkw),
            pl.BlockSpec((1, p["d_out_pad"]), lambda i: (0, 0), **wkw),
        ]
        relu_flags.append(p["relu"])

    kernel = functools.partial(_fused_mlp_kernel, relu_flags=tuple(relu_flags))
    return pl.pallas_call(
        kernel,
        out_shape=jax.ShapeDtypeStruct((B_pad, out_pad), out_dtype),
        grid=(n_tiles,),
        in_specs=in_specs,
        out_specs=pl.BlockSpec((tm, out_pad), lambda i: (i, 0)),
        compiler_params=pltpu.CompilerParams(
            # Megacore batch split only when there are >=2 tiles (avoids
            # duplicating the resident weights into both TCs on v7x).
            dimension_semantics=("parallel",) if n_tiles > 1 else ("arbitrary",),
            vmem_limit_bytes=vmem_limit),
        cost_estimate=cost,
    )(*flat_inputs)


# ----------------------------------------------------------------------------
# Fallback path: per-layer M/N/K-tiled matmul (used only when the resident
# weight footprint does not fit VMEM, e.g. very wide layers on v7x).
# ----------------------------------------------------------------------------
def _layer_matmul_kernel(x_ref, w_ref, b_ref, o_ref, acc_ref, *, relu):
    @pl.when(pl.program_id(2) == 0)
    def _():
        acc_ref[...] = jnp.zeros_like(acc_ref)

    wv = w_ref[...]
    acc_ref[...] += jnp.dot(x_ref[...].astype(wv.dtype), wv,
                            preferred_element_type=jnp.float32)

    @pl.when(pl.program_id(2) == pl.num_programs(2) - 1)
    def _():
        y = acc_ref[...] + b_ref[...]
        if relu:
            y = jnp.maximum(y, 0.0)
        o_ref[...] = y.astype(o_ref.dtype)


def _per_layer_forward(x_p, prepared, out_dtype, vmem_cap):
    h = x_p
    for p in prepared:
        M, K = h.shape
        N = p["d_out_pad"]
        tm = _largest_tile(M)
        tn = _largest_tile(N, (512, 256, 128))
        tk = _largest_tile(K, (512, 256, 128))
        w_bytes = p["w"].dtype.itemsize
        x_bytes = jnp.dtype(h.dtype).itemsize
        o_bytes = jnp.dtype(out_dtype).itemsize
        needed = (2 * (tm * tk * x_bytes + tk * tn * w_bytes + tn * 4
                       + tm * tn * o_bytes) + tm * tn * 4)
        vmem_limit = int(min(vmem_cap, max(needed * 1.5, 32 * 2 ** 20)))
        cost = pl.CostEstimate(
            flops=2 * M * K * N, transcendentals=0,
            bytes_accessed=M * K * x_bytes + K * N * w_bytes + 4 * N
                           + M * N * o_bytes)
        kernel = functools.partial(_layer_matmul_kernel, relu=p["relu"])
        h = pl.pallas_call(
            kernel,
            out_shape=jax.ShapeDtypeStruct((M, N), out_dtype),
            grid=(M // tm, N // tn, K // tk),
            in_specs=[pl.BlockSpec((tm, tk), lambda i, j, k: (i, k)),
                      pl.BlockSpec((tk, tn), lambda i, j, k: (k, j)),
                      pl.BlockSpec((1, tn), lambda i, j, k: (0, j))],
            out_specs=pl.BlockSpec((tm, tn), lambda i, j, k: (i, j)),
            scratch_shapes=[pltpu.VMEM((tm, tn), jnp.float32)],
            compiler_params=pltpu.CompilerParams(
                dimension_semantics=("parallel", "parallel", "arbitrary"),
                vmem_limit_bytes=vmem_limit),
            cost_estimate=cost,
        )(h, p["w"], p["b"])
    return h


# ----------------------------------------------------------------------------
# Forward wrapper.
# ----------------------------------------------------------------------------
def mlp_forward(x, prepared):
    orig_shape = x.shape
    x2 = x.reshape(-1, orig_shape[-1])
    B, d_in = x2.shape
    assert d_in == prepared[0]["d_in"], "input feature mismatch"
    out_dtype = x.dtype
    x_bytes = jnp.dtype(out_dtype).itemsize

    in_pad = prepared[0]["d_in_pad"]
    out_pad = prepared[-1]["d_out_pad"]
    d_out = prepared[-1]["d_out"]
    max_pad = max([in_pad] + [p["d_out_pad"] for p in prepared])

    resident_bytes = sum(p["w"].size * p["w"].dtype.itemsize
                         + p["b"].size * p["b"].dtype.itemsize
                         for p in prepared)

    vmem_cap = _vmem_capacity_bytes()
    vmem_budget = int(vmem_cap * 0.75)

    # Per-batch-row activation VMEM: double-buffered in/out blocks plus the
    # in-flight f32 intermediate and its bf16 copy for the MXU (generous).
    bytes_per_row = 2 * in_pad * x_bytes + 2 * out_pad * x_bytes + 6 * max_pad
    act_budget = vmem_budget - resident_bytes
    fused_ok = act_budget >= 8 * bytes_per_row

    if fused_ok:
        # Biggest batch tile whose activation working set still fits VMEM.
        tm = _SUBLANE
        cands = ([_round_up(B, _SUBLANE)] if B <= 1024 else []) + \
                [1024, 512, 256, 128, 64, 32, 16, 8]
        for cand in cands:
            if cand <= max(_SUBLANE, _round_up(B, _SUBLANE)) and \
               cand * bytes_per_row <= act_budget:
                tm = cand
                break
        B_pad = _round_up(B, tm)
    else:
        tm = min(512, _round_up(B, _SUBLANE))
        B_pad = _round_up(B, tm)

    if (B_pad, in_pad) != (B, d_in):
        x_p = jnp.pad(x2, ((0, B_pad - B), (0, in_pad - d_in)))
    else:
        x_p = x2

    if fused_ok:
        flops, prev = 0, in_pad
        for p in prepared:
            flops += 2 * B_pad * prev * p["d_out_pad"]
            prev = p["d_out_pad"]
        cost = pl.CostEstimate(
            flops=flops, transcendentals=0,
            bytes_accessed=int(x_p.size * x_bytes + resident_bytes
                               + B_pad * out_pad * x_bytes))
        vmem_limit = int(min(vmem_cap,
                             max(1.3 * (2 * resident_bytes + tm * bytes_per_row),
                                 32 * 2 ** 20)))
        out = None
        # Single-buffered resident weights first (halves their VMEM footprint),
        # then default double buffering, then the per-layer fallback.
        for single_buffer in (True, False):
            try:
                out = _fused_call(x_p, prepared, tm, out_dtype,
                                  single_buffer, vmem_limit, cost)
                break
            except Exception:
                out = None
        if out is None:
            out = _per_layer_forward(x_p, prepared, out_dtype, vmem_cap)
    else:
        out = _per_layer_forward(x_p, prepared, out_dtype, vmem_cap)

    out = out[:B, :d_out]
    return out.reshape(orig_shape[:-1] + (d_out,))


def mlp_forward_ref(x, params):
    h = x
    for w, b, apply_relu in params:
        h = h @ w + b
        if apply_relu:
            h = jnp.maximum(h, 0.0)
    return h


# ----------------------------------------------------------------------------
# Parameter init mirroring the PyTorch module:
#   for each hidden size: Linear -> ReLU ; if out_features > 0: final Linear.
# ----------------------------------------------------------------------------
def init_mlp_params(key, in_features, out_features=0, hidden=None):
    if hidden is None:
        hidden = [64]
    params = []
    dims = [in_features] + list(hidden)
    for i in range(len(hidden)):
        key, kw, kb = jax.random.split(key, 3)
        bound = 1.0 / float(jnp.sqrt(dims[i]))
        w = jax.random.uniform(kw, (dims[i], dims[i + 1]), jnp.float32, -bound, bound)
        b = jax.random.uniform(kb, (dims[i + 1],), jnp.float32, -bound, bound)
        params.append((w, b, True))
    if out_features > 0:
        key, kw, kb = jax.random.split(key, 3)
        bound = 1.0 / float(jnp.sqrt(hidden[-1]))
        w = jax.random.uniform(kw, (hidden[-1], out_features), jnp.float32, -bound, bound)
        b = jax.random.uniform(kb, (out_features,), jnp.float32, -bound, bound)
        params.append((w, b, False))
    return params


if __name__ == "__main__":
    key = jax.random.PRNGKey(0)

    batch = 8
    in_features = 32
    hidden = [64]          # default from the PyTorch module
    out_features = 16

    k_x, k_p = jax.random.split(key)
    x = jax.random.normal(k_x, (batch, in_features), jnp.float32)
    params = init_mlp_params(k_p, in_features, out_features, hidden)

    # Pad + cast once; reuse for every forward call.
    prepared = prepare_mlp_params(params, compute_dtype=jnp.bfloat16)

    y = mlp_forward(x, prepared)
    y = jax.block_until_ready(y)

    # sanity check against a plain-JAX f32 reference (bf16 MXU inputs -> loose tol)
    y_ref = mlp_forward_ref(x, params)
    assert y.shape == (batch, out_features)
    assert jnp.allclose(y, y_ref, atol=5e-2, rtol=5e-2), \
        float(jnp.max(jnp.abs(y - y_ref)))

    print("KERNEL_OK")
</pallas_src>

<mosaic_0001>
module attributes {stable_mosaic.version = 11 : i64} {
  func.func @_fused_mlp_kernel(%arg0: i32, %arg1: memref<8x128xf32, #tpu.memory_space<vmem>>, %arg2: memref<128x128xbf16, #tpu.memory_space<vmem>>, %arg3: memref<1x128xf32, #tpu.memory_space<vmem>>, %arg4: memref<128x128xbf16, #tpu.memory_space<vmem>>, %arg5: memref<1x128xf32, #tpu.memory_space<vmem>>, %arg6: memref<8x128xf32, #tpu.memory_space<vmem>>) attributes {dimension_semantics = [#tpu.dimension_semantics<arbitrary>], iteration_bounds = array<i64: 1>, scalar_prefetch = 0 : i64, scratch_operands = 0 : i64, tpu.core_type = #tpu.core_type<tc>, window_params = [{transform_indices = @transform_0, window_bounds = array<i64: 8, 128>}, {pipeline_mode = #tpu.pipeline_mode<synchronous>, transform_indices = @transform_1, window_bounds = array<i64: 128, 128>}, {pipeline_mode = #tpu.pipeline_mode<synchronous>, transform_indices = @transform_2, window_bounds = array<i64: 1, 128>}, {pipeline_mode = #tpu.pipeline_mode<synchronous>, transform_indices = @transform_3, window_bounds = array<i64: 128, 128>}, {pipeline_mode = #tpu.pipeline_mode<synchronous>, transform_indices = @transform_4, window_bounds = array<i64: 1, 128>}, {transform_indices = @transform_5, window_bounds = array<i64: 8, 128>}]} {
    %c0 = arith.constant 0 : index
    %c0_0 = arith.constant 0 : index
    %0 = vector.load %arg1[%c0, %c0_0] : memref<8x128xf32, #tpu.memory_space<vmem>>, vector<8x128xf32>
    %c0_1 = arith.constant 0 : index
    %c0_2 = arith.constant 0 : index
    %1 = vector.load %arg2[%c0_1, %c0_2] : memref<128x128xbf16, #tpu.memory_space<vmem>>, vector<128x128xbf16>
    %c0_3 = arith.constant 0 : index
    %c0_4 = arith.constant 0 : index
    %2 = vector.load %arg3[%c0_3, %c0_4] : memref<1x128xf32, #tpu.memory_space<vmem>>, vector<1x128xf32>
    %3 = arith.truncf %0 : vector<8x128xf32> to vector<8x128xbf16>
    %cst = arith.constant dense<0.000000e+00> : vector<8x128xf32>
    %4 = tpu.matmul %3, %1, %cst {dimension_numbers = #tpu.dot_dimension_numbers<[1], [0], [0], [1], [0, 0, 1, 1], [], []>} : vector<8x128xbf16>, vector<128x128xbf16>, vector<8x128xf32> -> vector<8x128xf32>
    %5 = vector.broadcast %2 : vector<1x128xf32> to vector<8x128xf32>
    %6 = arith.addf %4, %5 : vector<8x128xf32>
    %cst_5 = arith.constant 0.000000e+00 : f32
    %7 = vector.broadcast %cst_5 : f32 to vector<8x128xf32>
    %8 = arith.maximumf %6, %7 : vector<8x128xf32>
    %c0_6 = arith.constant 0 : index
    %c0_7 = arith.constant 0 : index
    %9 = vector.load %arg4[%c0_6, %c0_7] : memref<128x128xbf16, #tpu.memory_space<vmem>>, vector<128x128xbf16>
    %c0_8 = arith.constant 0 : index
    %c0_9 = arith.constant 0 : index
    %10 = vector.load %arg5[%c0_8, %c0_9] : memref<1x128xf32, #tpu.memory_space<vmem>>, vector<1x128xf32>
    %11 = arith.truncf %8 : vector<8x128xf32> to vector<8x128xbf16>
    %cst_10 = arith.constant dense<0.000000e+00> : vector<8x128xf32>
    %12 = tpu.matmul %11, %9, %cst_10 {dimension_numbers = #tpu.dot_dimension_numbers<[1], [0], [0], [1], [0, 0, 1, 1], [], []>} : vector<8x128xbf16>, vector<128x128xbf16>, vector<8x128xf32> -> vector<8x128xf32>
    %13 = vector.broadcast %10 : vector<1x128xf32> to vector<8x128xf32>
    %14 = arith.addf %12, %13 : vector<8x128xf32>
    %c0_11 = arith.constant 0 : index
    %c0_12 = arith.constant 0 : index
    %15 = vector.load %arg6[%c0_11, %c0_12] : memref<8x128xf32, #tpu.memory_space<vmem>>, vector<8x128xf32>
    tpu.vector_store %arg6[%c0_11, %c0_12], %14 {strides = array<i32>} : memref<8x128xf32, #tpu.memory_space<vmem>>, vector<8x128xf32>,
    return
  }
  func.func @transform_0(%arg0: i32) -> (i32, i32) {
    %c0_i32 = arith.constant 0 : i32
    %c0_i32_0 = arith.constant 0 : i32
    return %arg0, %c0_i32 : i32, i32
  }
  func.func @transform_1(%arg0: i32) -> (i32, i32) {
    %c0_i32 = arith.constant 0 : i32
    %c0_i32_0 = arith.constant 0 : i32
    %c0_i32_1 = arith.constant 0 : i32
    return %c0_i32, %c0_i32_0 : i32, i32
  }
  func.func @transform_2(%arg0: i32) -> (i32, i32) {
    %c0_i32 = arith.constant 0 : i32
    %c0_i32_0 = arith.constant 0 : i32
    %c0_i32_1 = arith.constant 0 : i32
    return %c0_i32, %c0_i32_0 : i32, i32
  }
  func.func @transform_3(%arg0: i32) -> (i32, i32) {
    %c0_i32 = arith.constant 0 : i32
    %c0_i32_0 = arith.constant 0 : i32
    %c0_i32_1 = arith.constant 0 : i32
    return %c0_i32, %c0_i32_0 : i32, i32
  }
  func.func @transform_4(%arg0: i32) -> (i32, i32) {
    %c0_i32 = arith.constant 0 : i32
    %c0_i32_0 = arith.constant 0 : i32
    %c0_i32_1 = arith.constant 0 : i32
    return %c0_i32, %c0_i32_0 : i32, i32
  }
  func.func @transform_5(%arg0: i32) -> (i32, i32) {
    %c0_i32 = arith.constant 0 : i32
    %c0_i32_0 = arith.constant 0 : i32
    return %arg0, %c0_i32 : i32, i32
  }
}

module attributes {stable_mosaic.version = 11 : i64} {
  func.func @_fused_mlp_kernel(%arg0: i32, %arg1: memref<8x128xf32, #tpu.memory_space<vmem>>, %arg2: memref<128x128xbf16, #tpu.memory_space<vmem>>, %arg3: memref<1x128xf32, #tpu.memory_space<vmem>>, %arg4: memref<128x128xbf16, #tpu.memory_space<vmem>>, %arg5: memref<1x128xf32, #tpu.memory_space<vmem>>, %arg6: memref<8x128xf32, #tpu.memory_space<vmem>>) attributes {dimension_semantics = [#tpu.dimension_semantics<arbitrary>], iteration_bounds = array<i64: 1>, scalar_prefetch = 0 : i64, scratch_operands = 0 : i64, tpu.core_type = #tpu.core_type<tc>, window_params = [{transform_indices = @transform_0, window_bounds = array<i64: 8, 128>}, {pipeline_mode = #tpu.pipeline_mode<synchronous>, transform_indices = @transform_1, window_bounds = array<i64: 128, 128>}, {pipeline_mode = #tpu.pipeline_mode<synchronous>, transform_indices = @transform_2, window_bounds = array<i64: 1, 128>}, {pipeline_mode = #tpu.pipeline_mode<synchronous>, transform_indices = @transform_3, window_bounds = array<i64: 128, 128>}, {pipeline_mode = #tpu.pipeline_mode<synchronous>, transform_indices = @transform_4, window_bounds = array<i64: 1, 128>}, {transform_indices = @transform_5, window_bounds = array<i64: 8, 128>}]} {
    %c0 = arith.constant 0 : index
    %c0_0 = arith.constant 0 : index
    %0 = vector.load %arg1[%c0, %c0_0] : memref<8x128xf32, #tpu.memory_space<vmem>>, vector<8x128xf32>
    %c0_1 = arith.constant 0 : index
    %c0_2 = arith.constant 0 : index
    %1 = vector.load %arg2[%c0_1, %c0_2] : memref<128x128xbf16, #tpu.memory_space<vmem>>, vector<128x128xbf16>
    %c0_3 = arith.constant 0 : index
    %c0_4 = arith.constant 0 : index
    %2 = vector.load %arg3[%c0_3, %c0_4] : memref<1x128xf32, #tpu.memory_space<vmem>>, vector<1x128xf32>
    %3 = arith.truncf %0 : vector<8x128xf32> to vector<8x128xbf16>
    %cst = arith.constant dense<0.000000e+00> : vector<8x128xf32>
    %4 = tpu.matmul %3, %1, %cst {dimension_numbers = #tpu.dot_dimension_numbers<[1], [0], [0], [1], [0, 0, 1, 1], [], []>} : vector<8x128xbf16>, vector<128x128xbf16>, vector<8x128xf32> -> vector<8x128xf32>
    %5 = vector.broadcast %2 : vector<1x128xf32> to vector<8x128xf32>
    %6 = arith.addf %4, %5 : vector<8x128xf32>
    %cst_5 = arith.constant 0.000000e+00 : f32
    %7 = vector.broadcast %cst_5 : f32 to vector<8x128xf32>
    %8 = arith.maximumf %6, %7 : vector<8x128xf32>
    %c0_6 = arith.constant 0 : index
    %c0_7 = arith.constant 0 : index
    %9 = vector.load %arg4[%c0_6, %c0_7] : memref<128x128xbf16, #tpu.memory_space<vmem>>, vector<128x128xbf16>
    %c0_8 = arith.constant 0 : index
    %c0_9 = arith.constant 0 : index
    %10 = vector.load %arg5[%c0_8, %c0_9] : memref<1x128xf32, #tpu.memory_space<vmem>>, vector<1x128xf32>
    %11 = arith.truncf %8 : vector<8x128xf32> to vector<8x128xbf16>
    %cst_10 = arith.constant dense<0.000000e+00> : vector<8x128xf32>
    %12 = tpu.matmul %11, %9, %cst_10 {dimension_numbers = #tpu.dot_dimension_numbers<[1], [0], [0], [1], [0, 0, 1, 1], [], []>} : vector<8x128xbf16>, vector<128x128xbf16>, vector<8x128xf32> -> vector<8x128xf32>
    %13 = vector.broadcast %10 : vector<1x128xf32> to vector<8x128xf32>
    %14 = arith.addf %12, %13 : vector<8x128xf32>
    %c0_11 = arith.constant 0 : index
    %c0_12 = arith.constant 0 : index
    %15 = vector.load %arg6[%c0_11, %c0_12] : memref<8x128xf32, #tpu.memory_space<vmem>>, vector<8x128xf32>
    tpu.vector_store %arg6[%c0_11, %c0_12], %14 {strides = array<i32>} : memref<8x128xf32, #tpu.memory_space<vmem>>, vector<8x128xf32>,
    return
  }
  func.func @transform_0(%arg0: i32) -> (i32, i32) {
    %c0_i32 = arith.constant 0 : i32
    %c0_i32_0 = arith.constant 0 : i32
    return %arg0, %c0_i32 : i32, i32
  }
  func.func @transform_1(%arg0: i32) -> (i32, i32) {
    %c0_i32 = arith.constant 0 : i32
    %c0_i32_0 = arith.constant 0 : i32
    %c0_i32_1 = arith.constant 0 : i32
    return %c0_i32, %c0_i32_0 : i32, i32
  }
  func.func @transform_2(%arg0: i32) -> (i32, i32) {
    %c0_i32 = arith.constant 0 : i32
    %c0_i32_0 = arith.constant 0 : i32
    %c0_i32_1 = arith.constant 0 : i32
    return %c0_i32, %c0_i32_0 : i32, i32
  }
  func.func @transform_3(%arg0: i32) -> (i32, i32) {
    %c0_i32 = arith.constant 0 : i32
    %c0_i32_0 = arith.constant 0 : i32
    %c0_i32_1 = arith.constant 0 : i32
    return %c0_i32, %c0_i32_0 : i32, i32
  }
  func.func @transform_4(%arg0: i32) -> (i32, i32) {
    %c0_i32 = arith.constant 0 : i32
    %c0_i32_0 = arith.constant 0 : i32
    %c0_i32_1 = arith.constant 0 : i32
    return %c0_i32, %c0_i32_0 : i32, i32
  }
  func.func @transform_5(%arg0: i32) -> (i32, i32) {
    %c0_i32 = arith.constant 0 : i32
    %c0_i32_0 = arith.constant 0 : i32
    return %arg0, %c0_i32 : i32, i32
  }
}

module attributes {stable_mosaic.version = 11 : i64} {
  func.func @_layer_matmul_kernel(%arg0: i32, %arg1: i32, %arg2: i32, %arg3: memref<8x128xf32, #tpu.memory_space<vmem>>, %arg4: memref<128x128xbf16, #tpu.memory_space<vmem>>, %arg5: memref<1x128xf32, #tpu.memory_space<vmem>>, %arg6: memref<8x128xf32, #tpu.memory_space<vmem>>, %arg7: memref<8x128xf32, #tpu.memory_space<vmem>>) attributes {dimension_semantics = [#tpu.dimension_semantics<parallel>, #tpu.dimension_semantics<parallel>, #tpu.dimension_semantics<arbitrary>], iteration_bounds = array<i64: 1, 1, 1>, scalar_prefetch = 0 : i64, scratch_operands = 1 : i64, tpu.core_type = #tpu.core_type<tc>, window_params = [{transform_indices = @transform_0, window_bounds = array<i64: 8, 128>}, {transform_indices = @transform_1, window_bounds = array<i64: 128, 128>}, {transform_indices = @transform_2, window_bounds = array<i64: 1, 128>}, {transform_indices = @transform_3, window_bounds = array<i64: 8, 128>}]} {
    %c0_i32 = arith.constant 0 : i32
    %0 = arith.cmpi eq, %arg2, %c0_i32 : i32
    %1 = arith.extui %0 : i1 to i32
    %c0_i32_0 = arith.constant 0 : i32
    %2 = arith.cmpi ne, %1, %c0_i32_0 : i32
    scf.if %2 {
      %cst_10 = arith.constant 0.000000e+00 : f32
      %13 = vector.broadcast %cst_10 : f32 to vector<8x128xf32>
      %c0_11 = arith.constant 0 : index
      %c0_12 = arith.constant 0 : index
      %14 = vector.load %arg7[%c0_11, %c0_12] : memref<8x128xf32, #tpu.memory_space<vmem>>, vector<8x128xf32>
      tpu.vector_store %arg7[%c0_11, %c0_12], %13 {strides = array<i32>} : memref<8x128xf32, #tpu.memory_space<vmem>>, vector<8x128xf32>,
    } else {
    }
    %c0 = arith.constant 0 : index
    %c0_1 = arith.constant 0 : index
    %3 = vector.load %arg4[%c0, %c0_1] : memref<128x128xbf16, #tpu.memory_space<vmem>>, vector<128x128xbf16>
    %c0_2 = arith.constant 0 : index
    %c0_3 = arith.constant 0 : index
    %4 = vector.load %arg7[%c0_2, %c0_3] : memref<8x128xf32, #tpu.memory_space<vmem>>, vector<8x128xf32>
    %c0_4 = arith.constant 0 : index
    %c0_5 = arith.constant 0 : index
    %5 = vector.load %arg3[%c0_4, %c0_5] : memref<8x128xf32, #tpu.memory_space<vmem>>, vector<8x128xf32>
    %6 = arith.truncf %5 : vector<8x128xf32> to vector<8x128xbf16>
    %cst = arith.constant dense<0.000000e+00> : vector<8x128xf32>
    %7 = tpu.matmul %6, %3, %cst {dimension_numbers = #tpu.dot_dimension_numbers<[1], [0], [0], [1], [0, 0, 1, 1], [], []>} : vector<8x128xbf16>, vector<128x128xbf16>, vector<8x128xf32> -> vector<8x128xf32>
    %8 = arith.addf %4, %7 : vector<8x128xf32>
    %c0_6 = arith.constant 0 : index
    %c0_7 = arith.constant 0 : index
    %9 = vector.load %arg7[%c0_6, %c0_7] : memref<8x128xf32, #tpu.memory_space<vmem>>, vector<8x128xf32>
    tpu.vector_store %arg7[%c0_6, %c0_7], %8 {strides = array<i32>} : memref<8x128xf32, #tpu.memory_space<vmem>>, vector<8x128xf32>,
    %c0_i32_8 = arith.constant 0 : i32
    %10 = arith.cmpi eq, %arg2, %c0_i32_8 : i32
    %11 = arith.extui %10 : i1 to i32
    %c0_i32_9 = arith.constant 0 : i32
    %12 = arith.cmpi ne, %11, %c0_i32_9 : i32
    scf.if %12 {
      %c0_10 = arith.constant 0 : index
      %c0_11 = arith.constant 0 : index
      %13 = vector.load %arg7[%c0_10, %c0_11] : memref<8x128xf32, #tpu.memory_space<vmem>>, vector<8x128xf32>
      %c0_12 = arith.constant 0 : index
      %c0_13 = arith.constant 0 : index
      %14 = vector.load %arg5[%c0_12, %c0_13] : memref<1x128xf32, #tpu.memory_space<vmem>>, vector<1x128xf32>
      %15 = vector.broadcast %14 : vector<1x128xf32> to vector<8x128xf32>
      %16 = arith.addf %13, %15 : vector<8x128xf32>
      %cst_14 = arith.constant 0.000000e+00 : f32
      %17 = vector.broadcast %cst_14 : f32 to vector<8x128xf32>
      %18 = arith.maximumf %16, %17 : vector<8x128xf32>
      %c0_15 = arith.constant 0 : index
      %c0_16 = arith.constant 0 : index
      %19 = vector.load %arg6[%c0_15, %c0_16] : memref<8x128xf32, #tpu.memory_space<vmem>>, vector<8x128xf32>
      tpu.vector_store %arg6[%c0_15, %c0_16], %18 {strides = array<i32>} : memref<8x128xf32, #tpu.memory_space<vmem>>, vector<8x128xf32>,
    } else {
    }
    return
  }
  func.func @transform_0(%arg0: i32, %arg1: i32, %arg2: i32) -> (i32, i32) {
    %c0_i32 = arith.constant 0 : i32
    return %arg0, %arg2 : i32, i32
  }
  func.func @transform_1(%arg0: i32, %arg1: i32, %arg2: i32) -> (i32, i32) {
    %c0_i32 = arith.constant 0 : i32
    return %arg2, %arg1 : i32, i32
  }
  func.func @transform_2(%arg0: i32, %arg1: i32, %arg2: i32) -> (i32, i32) {
    %c0_i32 = arith.constant 0 : i32
    %c0_i32_0 = arith.constant 0 : i32
    return %c0_i32, %arg1 : i32, i32
  }
  func.func @transform_3(%arg0: i32, %arg1: i32, %arg2: i32) -> (i32, i32) {
    %c0_i32 = arith.constant 0 : i32
    return %arg0, %arg1 : i32, i32
  }
}

</mosaic_0001>

<llo_original>
// kernel: tpu_custom_call.1
$region0: #{tpu_custom_call.1}
  #allocation0 [shape = 'u32[]', space=smem, size = 0x4, offset = 0x4, fixed_abs, tag = 'smem constant byte address 0x4 - core index']
  #allocation1 [shape = 'u32[144,128]{1,0:T(1,128)}', space=vmem, size = 0x12000, scoped, tag = 'internal scratch']
  %s0 = inlined_call_operand.hbm [shape: f32[8,128], index: 0, kind: input, shape index: {}]
  %s1 = inlined_call_operand.hbm [shape: bf16[128,128], index: 1, kind: input, shape index: {}]
  %s2 = inlined_call_operand.vmem [shape: f32[1,128], index: 2, kind: input, shape index: {}]
  %s3 = inlined_call_operand.hbm [shape: bf16[128,128], index: 3, kind: input, shape index: {}]
  %s4 = inlined_call_operand.vmem [shape: f32[1,128], index: 4, kind: input, shape index: {}]
  %s5 = inlined_call_operand.hbm [shape: f32[8,128], index: 5, kind: output, shape index: {}]
  %s6 = sld [smem:[#allocation0]]
  $region42: #{tpu_custom_call.1} parent=0
    _
  %s8 = ssub.s32 1, %s6
  %s9 = scalar_select 0, %s8, %s6
  $region1: #{tpu_custom_call.1} parent=0
    #allocation2 [shape = 'u8[4096]{0}', space=vmem, size = 0x1000, scoped, tag = 'input window, operand 0, single buffered']
    #allocation3 [shape = 's32[1]{0}', space=sflag, size = 0x4, scoped, tag = 'scoped memory for tpu_custom_call.1']
    #allocation4 [shape = 's32[1]{0}', space=sflag, size = 0x4, scoped, tag = 'scoped memory for tpu_custom_call.1']
    #allocation5 [shape = 'u8[32768]{0}', space=vmem, size = 0x8000, scoped, tag = 'input window, operand 1, single buffered']
    #allocation6 [shape = 's32[1]{0}', space=sflag, size = 0x4, scoped, tag = 'scoped memory for tpu_custom_call.1']
    #allocation7 [shape = 'u8[32768]{0}', space=vmem, size = 0x8000, scoped, tag = 'input window, operand 3, single buffered']
    #allocation8 [shape = 'u8[4096]{0}', space=vmem, size = 0x1000, scoped, tag = 'output window, operand 0, single buffered']
    %10 = vsyncpa [#allocation3], 0
    %11 = vsyncpa [#allocation6], 0
    %12 = vsyncpa [#allocation4], 0
    // Predicated region
    $region2: #{tpu_custom_call.1} parent=1 // pred_check
      _
    $region3: #{tpu_custom_call.1} parent=1 // pred_check_branch
      %14 = sbr.rel (0) target = $region5
    $region4: #{tpu_custom_call.1} parent=1 // pred_region
      %s16 = ssub.s32 128, 128
      %17 = vsyncadd [#allocation3], %s16
      %s19 = sshll.u32 [#allocation2], 4
      %s20 = int_to_ptr.vmem [resolvable:$true] %s19
      %22 = dma.hbm_to_vmem [thread:$0]  %s0, 128, %s20, [#allocation3]
    $region5: #{tpu_custom_call.1} parent=1 // pred_fallthru
      _
    // Predicated region
    $region6: #{tpu_custom_call.1} parent=1 // pred_check
      _
    $region7: #{tpu_custom_call.1} parent=1 // pred_check_branch
      %24 = sbr.rel (0) target = $region9
    $region8: #{tpu_custom_call.1} parent=1 // pred_region
      %s26 = ssub.s32 1024, 1024
      %27 = vsyncadd [#allocation6], %s26
      %s28 = sshll.u32 [#allocation5], 4
      %s29 = int_to_ptr.vmem [resolvable:$true] %s28
      %34 = dma.hbm_to_vmem [thread:$0]  %s1, 1024, %s29, [#allocation6], 64, 64, 4
    $region9: #{tpu_custom_call.1} parent=1 // pred_fallthru
      _
    // Predicated region
    $region10: #{tpu_custom_call.1} parent=1 // pred_check
      _
    $region11: #{tpu_custom_call.1} parent=1 // pred_check_branch
      %36 = sbr.rel (0) target = $region13
    $region12: #{tpu_custom_call.1} parent=1 // pred_region
      _
    $region13: #{tpu_custom_call.1} parent=1 // pred_fallthru
      _
    // Predicated region
    $region14: #{tpu_custom_call.1} parent=1 // pred_check
      _
    $region15: #{tpu_custom_call.1} parent=1 // pred_check_branch
      %38 = sbr.rel (0) target = $region17
    $region16: #{tpu_custom_call.1} parent=1 // pred_region
      %s40 = ssub.s32 1024, 1024
      %41 = vsyncadd [#allocation6], %s40
      %s42 = sshll.u32 [#allocation7], 4
      %s43 = int_to_ptr.vmem [resolvable:$true] %s42
      %48 = dma.hbm_to_vmem [thread:$0]  %s3, 1024, %s43, [#allocation6], 64, 64, 4
    $region17: #{tpu_custom_call.1} parent=1 // pred_fallthru
      _
    // Predicated region
    $region18: #{tpu_custom_call.1} parent=1 // pred_check
      _
    $region19: #{tpu_custom_call.1} parent=1 // pred_check_branch
      %50 = sbr.rel (0) target = $region21
    $region20: #{tpu_custom_call.1} parent=1 // pred_region
      _
    $region21: #{tpu_custom_call.1} parent=1 // pred_fallthru
      _
    // Predicated region
    $region22: #{tpu_custom_call.1} parent=1 // pred_check
      _
    $region23: #{tpu_custom_call.1} parent=1 // pred_check_branch
      %52 = sbr.rel (0) target = $region25
    $region24: #{tpu_custom_call.1} parent=1 // pred_region
      %53 = dma.done [#allocation3], 128
    $region25: #{tpu_custom_call.1} parent=1 // pred_fallthru
      _
    // Predicated region
    $region26: #{tpu_custom_call.1} parent=1 // pred_check
      _
    $region27: #{tpu_custom_call.1} parent=1 // pred_check_branch
      %55 = sbr.rel (0) target = $region29
    $region28: #{tpu_custom_call.1} parent=1 // pred_region
      %56 = dma.done [#allocation6], 1024
    $region29: #{tpu_custom_call.1} parent=1 // pred_fallthru
      _
    // Predicated region
    $region30: #{tpu_custom_call.1} parent=1 // pred_check
      _
    $region31: #{tpu_custom_call.1} parent=1 // pred_check_branch
      %58 = sbr.rel (0) target = $region33
    $region32: #{tpu_custom_call.1} parent=1 // pred_region
      %59 = dma.done [#allocation6], 1024
    $region33: #{tpu_custom_call.1} parent=1 // pred_fallthru
      _
    %v61 = vld [vmem:[#allocation2] sm:$0xff]
    %v62 = vld [vmem:[#allocation5] sm:$0xf]
    %v63 = vld [vmem:[#allocation5 + $0x4] sm:$0xf]
    %v64 = vld [vmem:[#allocation5 + $0x8] sm:$0xf]
    %v65 = vld [vmem:[#allocation5 + $0xc] sm:$0xf]
    %v66 = vld [vmem:[#allocation5 + $0x10] sm:$0xf]
    %v67 = vld [vmem:[#allocation5 + $0x14] sm:$0xf]
    %v68 = vld [vmem:[#allocation5 + $0x18] sm:$0xf]
    %v69 = vld [vmem:[#allocation5 + $0x1c] sm:$0xf]
    %v70 = vld [vmem:[#allocation5 + $0x20] sm:$0xf]
    %v71 = vld [vmem:[#allocation5 + $0x24] sm:$0xf]
    %v72 = vld [vmem:[#allocation5 + $0x28] sm:$0xf]
    %v73 = vld [vmem:[#allocation5 + $0x2c] sm:$0xf]
    %v74 = vld [vmem:[#allocation5 + $0x30] sm:$0xf]
    %v75 = vld [vmem:[#allocation5 + $0x34] sm:$0xf]
    %v76 = vld [vmem:[#allocation5 + $0x38] sm:$0xf]
    %v77 = vld [vmem:[#allocation5 + $0x3c] sm:$0xf]
    %v78 = vld [vmem:[%s2] sm:$0x1]
    %v79 = vpack.c.bf16 %v61, %v61
    %v81 = vlaneseq
    %v82 = vshrl.u32 %v81, 7
    %v83 = vsub.s32 0, %v82
    %v84 = vrot.slane %v78, %v83
    %v102 = vunpack.c.l.b16 %v62
    %v103 = vunpack.c.l.b16 %v63
    %v104 = vunpack.c.l.b16 %v64
    %v105 = vunpack.c.l.b16 %v65
    %v106 = vunpack.c.l.b16 %v66
    %v107 = vunpack.c.l.b16 %v67
    %v108 = vunpack.c.l.b16 %v68
    %v109 = vunpack.c.l.b16 %v69
    %v110 = vunpack.c.l.b16 %v70
    %v111 = vunpack.c.l.b16 %v71
    %v112 = vunpack.c.l.b16 %v72
    %v113 = vunpack.c.l.b16 %v73
    %v114 = vunpack.c.l.b16 %v74
    %v115 = vunpack.c.l.b16 %v75
    %v116 = vunpack.c.l.b16 %v76
    %v117 = vunpack.c.l.b16 %v77
    %v118 = vpack.c.b16 %v103, %v102
    %v119 = vpack.c.b16 %v105, %v104
    %v120 = vpack.c.b16 %v107, %v106
    %v121 = vpack.c.b16 %v109, %v108
    %v122 = vpack.c.b16 %v111, %v110
    %v123 = vpack.c.b16 %v113, %v112
    %v124 = vpack.c.b16 %v115, %v114
    %v125 = vpack.c.b16 %v117, %v116
    %134 = vmatprep.subr.bf16.mxu0 0
    %135 = vmatpush1.bf16.msra.mxu0 %v125
    %136 = vmatprep.subr.bf16.mxu0 0
    %137 = vmatpush1.bf16.msra.mxu0 %v124
    %138 = vmatprep.subr.bf16.mxu0 0
    %139 = vmatpush1.bf16.msra.mxu0 %v123
    %140 = vmatprep.subr.bf16.mxu0 0
    %141 = vmatpush1.bf16.msra.mxu0 %v122
    %142 = vmatprep.subr.bf16.mxu0 0
    %143 = vmatpush1.bf16.msra.mxu0 %v121
    %144 = vmatprep.subr.bf16.mxu0 0
    %145 = vmatpush1.bf16.msra.mxu0 %v120
    %146 = vmatprep.subr.bf16.mxu0 0
    %147 = vmatpush1.bf16.msra.mxu0 %v119
    %148 = vmatprep.subr.bf16.mxu0 0
    %149 = vmatpush1.bf16.msra.mxu0 %v118
    %150 = vmatprep.subr.bf16.mxu0 0
    %151 = vmatpush2.bf16.msra.mxu0 0
    %152 = vmatprep.subr.bf16.mxu0 0
    %153 = vmatpush2.bf16.msra.mxu0 0
    %154 = vmatprep.subr.bf16.mxu0 0
    %155 = vmatpush2.bf16.msra.mxu0 0
    %156 = vmatprep.subr.bf16.mxu0 0
    %157 = vmatpush2.bf16.msra.mxu0 0
    %158 = vmatprep.subr.bf16.mxu0 0
    %159 = vmatpush2.bf16.msra.mxu0 0
    %160 = vmatprep.subr.bf16.mxu0 0
    %161 = vmatpush2.bf16.msra.mxu0 0
    %162 = vmatprep.subr.bf16.mxu0 0
    %163 = vmatpush2.bf16.msra.mxu0 0
    %164 = vmatprep.subr.bf16.mxu0 0
    %165 = vmatpush2.bf16.msra.mxu0 0
    %166 = vmatprep.mubr.bf16.mxu0 0
    %167 = vmatmul.mubr.bf16.gmra.mxu0 %v79
    %v168 = vpop.f32.mrf.mxu0
    %v169 = vadd.f32 %v84, %v168
    %v170 = vpop.f32.mrf.mxu0
    %v171 = vpop.f32.mrf.mxu0
    %v172 = vpop.f32.mrf.mxu0
    %173 = vdwg.mxu0
    %v174 = vmax.f32 %v169, 0.0
    %v175 = vld [vmem:[#allocation7] sm:$0xf]
    %v176 = vld [vmem:[#allocation7 + $0x4] sm:$0xf]
    %v177 = vld [vmem:[#allocation7 + $0x8] sm:$0xf]
    %v178 = vld [vmem:[#allocation7 + $0xc] sm:$0xf]
    %v179 = vld [vmem:[#allocation7 + $0x10] sm:$0xf]
    %v180 = vld [vmem:[#allocation7 + $0x14] sm:$0xf]
    %v181 = vld [vmem:[#allocation7 + $0x18] sm:$0xf]
    %v182 = vld [vmem:[#allocation7 + $0x1c] sm:$0xf]
    %v183 = vld [vmem:[#allocation7 + $0x20] sm:$0xf]
    %v184 = vld [vmem:[#allocation7 + $0x24] sm:$0xf]
    %v185 = vld [vmem:[#allocation7 + $0x28] sm:$0xf]
    %v186 = vld [vmem:[#allocation7 + $0x2c] sm:$0xf]
    %v187 = vld [vmem:[#allocation7 + $0x30] sm:$0xf]
    %v188 = vld [vmem:[#allocation7 + $0x34] sm:$0xf]
    %v189 = vld [vmem:[#allocation7 + $0x38] sm:$0xf]
    %v190 = vld [vmem:[#allocation7 + $0x3c] sm:$0xf]
    %v191 = vld [vmem:[%s4] sm:$0x1]
    %v192 = vpack.c.bf16 %v174, %v174
    %v194 = vlaneseq
    %v195 = vshrl.u32 %v194, 7
    %v196 = vsub.s32 0, %v195
    %v197 = vrot.slane %v191, %v196
    %v215 = vunpack.c.l.b16 %v175
    %v216 = vunpack.c.l.b16 %v176
    %v217 = vunpack.c.l.b16 %v177
    %v218 = vunpack.c.l.b16 %v178
    %v219 = vunpack.c.l.b16 %v179
    %v220 = vunpack.c.l.b16 %v180
    %v221 = vunpack.c.l.b16 %v181
    %v222 = vunpack.c.l.b16 %v182
    %v223 = vunpack.c.l.b16 %v183
    %v224 = vunpack.c.l.b16 %v184
    %v225 = vunpack.c.l.b16 %v185
    %v226 = vunpack.c.l.b16 %v186
    %v227 = vunpack.c.l.b16 %v187
    %v228 = vunpack.c.l.b16 %v188
    %v229 = vunpack.c.l.b16 %v189
    %v230 = vunpack.c.l.b16 %v190
    %v231 = vpack.c.b16 %v216, %v215
    %v232 = vpack.c.b16 %v218, %v217
    %v233 = vpack.c.b16 %v220, %v219
    %v234 = vpack.c.b16 %v222, %v221
    %v235 = vpack.c.b16 %v224, %v223
    %v236 = vpack.c.b16 %v226, %v225
    %v237 = vpack.c.b16 %v228, %v227
    %v238 = vpack.c.b16 %v230, %v229
    %247 = vmatprep.subr.bf16.mxu0 0
    %248 = vmatpush1.bf16.msra.mxu0 %v238
    %249 = vmatprep.subr.bf16.mxu0 0
    %250 = vmatpush1.bf16.msra.mxu0 %v237
    %251 = vmatprep.subr.bf16.mxu0 0
    %252 = vmatpush1.bf16.msra.mxu0 %v236
    %253 = vmatprep.subr.bf16.mxu0 0
    %254 = vmatpush1.bf16.msra.mxu0 %v235
    %255 = vmatprep.subr.bf16.mxu0 0
    %256 = vmatpush1.bf16.msra.mxu0 %v234
    %257 = vmatprep.subr.bf16.mxu0 0
    %258 = vmatpush1.bf16.msra.mxu0 %v233
    %259 = vmatprep.subr.bf16.mxu0 0
    %260 = vmatpush1.bf16.msra.mxu0 %v232
    %261 = vmatprep.subr.bf16.mxu0 0
    %262 = vmatpush1.bf16.msra.mxu0 %v231
    %263 = vmatprep.subr.bf16.mxu0 0
    %264 = vmatpush2.bf16.msra.mxu0 0
    %265 = vmatprep.subr.bf16.mxu0 0
    %266 = vmatpush2.bf16.msra.mxu0 0
    %267 = vmatprep.subr.bf16.mxu0 0
    %268 = vmatpush2.bf16.msra.mxu0 0
    %269 = vmatprep.subr.bf16.mxu0 0
    %270 = vmatpush2.bf16.msra.mxu0 0
    %271 = vmatprep.subr.bf16.mxu0 0
    %272 = vmatpush2.bf16.msra.mxu0 0
    %273 = vmatprep.subr.bf16.mxu0 0
    %274 = vmatpush2.bf16.msra.mxu0 0
    %275 = vmatprep.subr.bf16.mxu0 0
    %276 = vmatpush2.bf16.msra.mxu0 0
    %277 = vmatprep.subr.bf16.mxu0 0
    %278 = vmatpush2.bf16.msra.mxu0 0
    %279 = vmatprep.mubr.bf16.mxu0 0
    %280 = vmatmul.mubr.bf16.gmra.mxu0 %v192
    %v281 = vpop.f32.mrf.mxu0
    %v282 = vadd.f32 %v197, %v281
    %v283 = vpop.f32.mrf.mxu0
    %v284 = vpop.f32.mrf.mxu0
    %v285 = vpop.f32.mrf.mxu0
    %286 = vdwg.mxu0
    %287 = vst [vmem:[#allocation8] sm:$0xff] %v282
    // Predicated region
    $region34: #{tpu_custom_call.1} parent=1 // pred_check
      _
    $region35: #{tpu_custom_call.1} parent=1 // pred_check_branch
      %289 = sbr.rel (0) target = $region37
    $region36: #{tpu_custom_call.1} parent=1 // pred_region
      %s291 = ssub.s32 128, 128
      %292 = vsyncadd [#allocation4], %s291
      %s294 = sshll.u32 [#allocation8], 4
      %s295 = int_to_ptr.vmem [resolvable:$true] %s294
      %297 = dma.vmem_to_hbm [thread:$0]  %s295, 128, %s5, [#allocation4]
    $region37: #{tpu_custom_call.1} parent=1 // pred_fallthru
      _
    // Predicated region
    $region38: #{tpu_custom_call.1} parent=1 // pred_check
      _
    $region39: #{tpu_custom_call.1} parent=1 // pred_check_branch
      %299 = sbr.rel (0) target = $region41
    $region40: #{tpu_custom_call.1} parent=1 // pred_region
      %300 = dma.done [#allocation4], 128
    $region41: #{tpu_custom_call.1} parent=1 // pred_fallthru
      _
    %301 = vsyncpa [#allocation3], 1
    %302 = vsyncpa [#allocation6], 1
    %303 = vsyncpa [#allocation4], 1

// kernel: tpu_custom_call.1
$region0: #{tpu_custom_call.1}
  #allocation0 [shape = 'u32[]', space=smem, size = 0x4, offset = 0x4, fixed_abs, tag = 'smem constant byte address 0x4 - core index']
  #allocation1 [shape = 'u32[144,128]{1,0:T(1,128)}', space=vmem, size = 0x12000, scoped, tag = 'internal scratch']
  %s0 = inlined_call_operand.hbm [shape: f32[8,128], index: 0, kind: input, shape index: {}]
  %s1 = inlined_call_operand.hbm [shape: bf16[128,128], index: 1, kind: input, shape index: {}]
  %s2 = inlined_call_operand.vmem [shape: f32[1,128], index: 2, kind: input, shape index: {}]
  %s3 = inlined_call_operand.hbm [shape: bf16[128,128], index: 3, kind: input, shape index: {}]
  %s4 = inlined_call_operand.vmem [shape: f32[1,128], index: 4, kind: input, shape index: {}]
  %s5 = inlined_call_operand.hbm [shape: f32[8,128], index: 5, kind: output, shape index: {}]
  %s6 = sld [smem:[#allocation0]]
  $region42: #{tpu_custom_call.1} parent=0
    _
  %s8 = ssub.s32 1, %s6
  %s9 = scalar_select 0, %s8, %s6
  $region1: #{tpu_custom_call.1} parent=0
    #allocation2 [shape = 'u8[4096]{0}', space=vmem, size = 0x1000, scoped, tag = 'input window, operand 0, single buffered']
    #allocation3 [shape = 's32[1]{0}', space=sflag, size = 0x4, scoped, tag = 'scoped memory for tpu_custom_call.1']
    #allocation4 [shape = 's32[1]{0}', space=sflag, size = 0x4, scoped, tag = 'scoped memory for tpu_custom_call.1']
    #allocation5 [shape = 'u8[32768]{0}', space=vmem, size = 0x8000, scoped, tag = 'input window, operand 1, single buffered']
    #allocation6 [shape = 's32[1]{0}', space=sflag, size = 0x4, scoped, tag = 'scoped memory for tpu_custom_call.1']
    #allocation7 [shape = 'u8[32768]{0}', space=vmem, size = 0x8000, scoped, tag = 'input window, operand 3, single buffered']
    #allocation8 [shape = 'u8[4096]{0}', space=vmem, size = 0x1000, scoped, tag = 'output window, operand 0, single buffered']
    %10 = vsyncpa [#allocation3], 0
    %11 = vsyncpa [#allocation6], 0
    %12 = vsyncpa [#allocation4], 0
    // Predicated region
    $region2: #{tpu_custom_call.1} parent=1 // pred_check
      _
    $region3: #{tpu_custom_call.1} parent=1 // pred_check_branch
      %14 = sbr.rel (0) target = $region5
    $region4: #{tpu_custom_call.1} parent=1 // pred_region
      %s16 = ssub.s32 128, 128
      %17 = vsyncadd [#allocation3], %s16
      %s19 = sshll.u32 [#allocation2], 4
      %s20 = int_to_ptr.vmem [resolvable:$true] %s19
      %22 = dma.hbm_to_vmem [thread:$0]  %s0, 128, %s20, [#allocation3]
    $region5: #{tpu_custom_call.1} parent=1 // pred_fallthru
      _
    // Predicated region
    $region6: #{tpu_custom_call.1} parent=1 // pred_check
      _
    $region7: #{tpu_custom_call.1} parent=1 // pred_check_branch
      %24 = sbr.rel (0) target = $region9
    $region8: #{tpu_custom_call.1} parent=1 // pred_region
      %s26 = ssub.s32 1024, 1024
      %27 = vsyncadd [#allocation6], %s26
      %s28 = sshll.u32 [#allocation5], 4
      %s29 = int_to_ptr.vmem [resolvable:$true] %s28
      %34 = dma.hbm_to_vmem [thread:$0]  %s1, 1024, %s29, [#allocation6], 64, 64, 4
    $region9: #{tpu_custom_call.1} parent=1 // pred_fallthru
      _
    // Predicated region
    $region10: #{tpu_custom_call.1} parent=1 // pred_check
      _
    $region11: #{tpu_custom_call.1} parent=1 // pred_check_branch
      %36 = sbr.rel (0) target = $region13
    $region12: #{tpu_custom_call.1} parent=1 // pred_region
      _
    $region13: #{tpu_custom_call.1} parent=1 // pred_fallthru
      _
    // Predicated region
    $region14: #{tpu_custom_call.1} parent=1 // pred_check
      _
    $region15: #{tpu_custom_call.1} parent=1 // pred_check_branch
      %38 = sbr.rel (0) target = $region17
    $region16: #{tpu_custom_call.1} parent=1 // pred_region
      %s40 = ssub.s32 1024, 1024
      %41 = vsyncadd [#allocation6], %s40
      %s42 = sshll.u32 [#allocation7], 4
      %s43 = int_to_ptr.vmem [resolvable:$true] %s42
      %48 = dma.hbm_to_vmem [thread:$0]  %s3, 1024, %s43, [#allocation6], 64, 64, 4
    $region17: #{tpu_custom_call.1} parent=1 // pred_fallthru
      _
    // Predicated region
    $region18: #{tpu_custom_call.1} parent=1 // pred_check
      _
    $region19: #{tpu_custom_call.1} parent=1 // pred_check_branch
      %50 = sbr.rel (0) target = $region21
    $region20: #{tpu_custom_call.1} parent=1 // pred_region
      _
    $region21: #{tpu_custom_call.1} parent=1 // pred_fallthru
      _
    // Predicated region
    $region22: #{tpu_custom_call.1} parent=1 // pred_check
      _
    $region23: #{tpu_custom_call.1} parent=1 // pred_check_branch
      %52 = sbr.rel (0) target = $region25
    $region24: #{tpu_custom_call.1} parent=1 // pred_region
      %53 = dma.done [#allocation3], 128
    $region25: #{tpu_custom_call.1} parent=1 // pred_fallthru
      _
    // Predicated region
    $region26: #{tpu_custom_call.1} parent=1 // pred_check
      _
    $region27: #{tpu_custom_call.1} parent=1 // pred_check_branch
      %55 = sbr.rel (0) target = $region29
    $region28: #{tpu_custom_call.1} parent=1 // pred_region
      %56 = dma.done [#allocation6], 1024
    $region29: #{tpu_custom_call.1} parent=1 // pred_fallthru
      _
    // Predicated region
    $region30: #{tpu_custom_call.1} parent=1 // pred_check
      _
    $region31: #{tpu_custom_call.1} parent=1 // pred_check_branch
      %58 = sbr.rel (0) target = $region33
    $region32: #{tpu_custom_call.1} parent=1 // pred_region
      %59 = dma.done [#allocation6], 1024
    $region33: #{tpu_custom_call.1} parent=1 // pred_fallthru
      _
    %v61 = vld [vmem:[#allocation2] sm:$0xff]
    %v62 = vld [vmem:[#allocation5] sm:$0xf]
    %v63 = vld [vmem:[#allocation5 + $0x4] sm:$0xf]
    %v64 = vld [vmem:[#allocation5 + $0x8] sm:$0xf]
    %v65 = vld [vmem:[#allocation5 + $0xc] sm:$0xf]
    %v66 = vld [vmem:[#allocation5 + $0x10] sm:$0xf]
    %v67 = vld [vmem:[#allocation5 + $0x14] sm:$0xf]
    %v68 = vld [vmem:[#allocation5 + $0x18] sm:$0xf]
    %v69 = vld [vmem:[#allocation5 + $0x1c] sm:$0xf]
    %v70 = vld [vmem:[#allocation5 + $0x20] sm:$0xf]
    %v71 = vld [vmem:[#allocation5 + $0x24] sm:$0xf]
    %v72 = vld [vmem:[#allocation5 + $0x28] sm:$0xf]
    %v73 = vld [vmem:[#allocation5 + $0x2c] sm:$0xf]
    %v74 = vld [vmem:[#allocation5 + $0x30] sm:$0xf]
    %v75 = vld [vmem:[#allocation5 + $0x34] sm:$0xf]
    %v76 = vld [vmem:[#allocation5 + $0x38] sm:$0xf]
    %v77 = vld [vmem:[#allocation5 + $0x3c] sm:$0xf]
    %v78 = vld [vmem:[%s2] sm:$0x1]
    %v79 = vpack.c.bf16 %v61, %v61
    %v81 = vlaneseq
    %v82 = vshrl.u32 %v81, 7
    %v83 = vsub.s32 0, %v82
    %v84 = vrot.slane %v78, %v83
    %v102 = vunpack.c.l.b16 %v62
    %v103 = vunpack.c.l.b16 %v63
    %v104 = vunpack.c.l.b16 %v64
    %v105 = vunpack.c.l.b16 %v65
    %v106 = vunpack.c.l.b16 %v66
    %v107 = vunpack.c.l.b16 %v67
    %v108 = vunpack.c.l.b16 %v68
    %v109 = vunpack.c.l.b16 %v69
    %v110 = vunpack.c.l.b16 %v70
    %v111 = vunpack.c.l.b16 %v71
    %v112 = vunpack.c.l.b16 %v72
    %v113 = vunpack.c.l.b16 %v73
    %v114 = vunpack.c.l.b16 %v74
    %v115 = vunpack.c.l.b16 %v75
    %v116 = vunpack.c.l.b16 %v76
    %v117 = vunpack.c.l.b16 %v77
    %v118 = vpack.c.b16 %v103, %v102
    %v119 = vpack.c.b16 %v105, %v104
    %v120 = vpack.c.b16 %v107, %v106
    %v121 = vpack.c.b16 %v109, %v108
    %v122 = vpack.c.b16 %v111, %v110
    %v123 = vpack.c.b16 %v113, %v112
    %v124 = vpack.c.b16 %v115, %v114
    %v125 = vpack.c.b16 %v117, %v116
    %134 = vmatprep.subr.bf16.mxu0 0
    %135 = vmatpush1.bf16.msra.mxu0 %v125
    %136 = vmatprep.subr.bf16.mxu0 0
    %137 = vmatpush1.bf16.msra.mxu0 %v124
    %138 = vmatprep.subr.bf16.mxu0 0
    %139 = vmatpush1.bf16.msra.mxu0 %v123
    %140 = vmatprep.subr.bf16.mxu0 0
    %141 = vmatpush1.bf16.msra.mxu0 %v122
    %142 = vmatprep.subr.bf16.mxu0 0
    %143 = vmatpush1.bf16.msra.mxu0 %v121
    %144 = vmatprep.subr.bf16.mxu0 0
    %145 = vmatpush1.bf16.msra.mxu0 %v120
    %146 = vmatprep.subr.bf16.mxu0 0
    %147 = vmatpush1.bf16.msra.mxu0 %v119
    %148 = vmatprep.subr.bf16.mxu0 0
    %149 = vmatpush1.bf16.msra.mxu0 %v118
    %150 = vmatprep.subr.bf16.mxu0 0
    %151 = vmatpush2.bf16.msra.mxu0 0
    %152 = vmatprep.subr.bf16.mxu0 0
    %153 = vmatpush2.bf16.msra.mxu0 0
    %154 = vmatprep.subr.bf16.mxu0 0
    %155 = vmatpush2.bf16.msra.mxu0 0
    %156 = vmatprep.subr.bf16.mxu0 0
    %157 = vmatpush2.bf16.msra.mxu0 0
    %158 = vmatprep.subr.bf16.mxu0 0
    %159 = vmatpush2.bf16.msra.mxu0 0
    %160 = vmatprep.subr.bf16.mxu0 0
    %161 = vmatpush2.bf16.msra.mxu0 0
    %162 = vmatprep.subr.bf16.mxu0 0
    %163 = vmatpush2.bf16.msra.mxu0 0
    %164 = vmatprep.subr.bf16.mxu0 0
    %165 = vmatpush2.bf16.msra.mxu0 0
    %166 = vmatprep.mubr.bf16.mxu0 0
    %167 = vmatmul.mubr.bf16.gmra.mxu0 %v79
    %v168 = vpop.f32.mrf.mxu0
    %v169 = vadd.f32 %v84, %v168
    %v170 = vpop.f32.mrf.mxu0
    %v171 = vpop.f32.mrf.mxu0
    %v172 = vpop.f32.mrf.mxu0
    %173 = vdwg.mxu0
    %v174 = vmax.f32 %v169, 0.0
    %v175 = vld [vmem:[#allocation7] sm:$0xf]
    %v176 = vld [vmem:[#allocation7 + $0x4] sm:$0xf]
    %v177 = vld [vmem:[#allocation7 + $0x8] sm:$0xf]
    %v178 = vld [vmem:[#allocation7 + $0xc] sm:$0xf]
    %v179 = vld [vmem:[#allocation7 + $0x10] sm:$0xf]
    %v180 = vld [vmem:[#allocation7 + $0x14] sm:$0xf]
    %v181 = vld [vmem:[#allocation7 + $0x18] sm:$0xf]
    %v182 = vld [vmem:[#allocation7 + $0x1c] sm:$0xf]
    %v183 = vld [vmem:[#allocation7 + $0x20] sm:$0xf]
    %v184 = vld [vmem:[#allocation7 + $0x24] sm:$0xf]
    %v185 = vld [vmem:[#allocation7 + $0x28] sm:$0xf]
    %v186 = vld [vmem:[#allocation7 + $0x2c] sm:$0xf]
    %v187 = vld [vmem:[#allocation7 + $0x30] sm:$0xf]
    %v188 = vld [vmem:[#allocation7 + $0x34] sm:$0xf]
    %v189 = vld [vmem:[#allocation7 + $0x38] sm:$0xf]
    %v190 = vld [vmem:[#allocation7 + $0x3c] sm:$0xf]
    %v191 = vld [vmem:[%s4] sm:$0x1]
    %v192 = vpack.c.bf16 %v174, %v174
    %v194 = vlaneseq
    %v195 = vshrl.u32 %v194, 7
    %v196 = vsub.s32 0, %v195
    %v197 = vrot.slane %v191, %v196
    %v215 = vunpack.c.l.b16 %v175
    %v216 = vunpack.c.l.b16 %v176
    %v217 = vunpack.c.l.b16 %v177
    %v218 = vunpack.c.l.b16 %v178
    %v219 = vunpack.c.l.b16 %v179
    %v220 = vunpack.c.l.b16 %v180
    %v221 = vunpack.c.l.b16 %v181
    %v222 = vunpack.c.l.b16 %v182
    %v223 = vunpack.c.l.b16 %v183
    %v224 = vunpack.c.l.b16 %v184
    %v225 = vunpack.c.l.b16 %v185
    %v226 = vunpack.c.l.b16 %v186
    %v227 = vunpack.c.l.b16 %v187
    %v228 = vunpack.c.l.b16 %v188
    %v229 = vunpack.c.l.b16 %v189
    %v230 = vunpack.c.l.b16 %v190
    %v231 = vpack.c.b16 %v216, %v215
    %v232 = vpack.c.b16 %v218, %v217
    %v233 = vpack.c.b16 %v220, %v219
    %v234 = vpack.c.b16 %v222, %v221
    %v235 = vpack.c.b16 %v224, %v223
    %v236 = vpack.c.b16 %v226, %v225
    %v237 = vpack.c.b16 %v228, %v227
    %v238 = vpack.c.b16 %v230, %v229
    %247 = vmatprep.subr.bf16.mxu0 0
    %248 = vmatpush1.bf16.msra.mxu0 %v238
    %249 = vmatprep.subr.bf16.mxu0 0
    %250 = vmatpush1.bf16.msra.mxu0 %v237
    %251 = vmatprep.subr.bf16.mxu0 0
    %252 = vmatpush1.bf16.msra.mxu0 %v236
    %253 = vmatprep.subr.bf16.mxu0 0
    %254 = vmatpush1.bf16.msra.mxu0 %v235
    %255 = vmatprep.subr.bf16.mxu0 0
    %256 = vmatpush1.bf16.msra.mxu0 %v234
    %257 = vmatprep.subr.bf16.mxu0 0
    %258 = vmatpush1.bf16.msra.mxu0 %v233
    %259 = vmatprep.subr.bf16.mxu0 0
    %260 = vmatpush1.bf16.msra.mxu0 %v232
    %261 = vmatprep.subr.bf16.mxu0 0
    %262 = vmatpush1.bf16.msra.mxu0 %v231
    %263 = vmatprep.subr.bf16.mxu0 0
    %264 = vmatpush2.bf16.msra.mxu0 0
    %265 = vmatprep.subr.bf16.mxu0 0
    %266 = vmatpush2.bf16.msra.mxu0 0
    %267 = vmatprep.subr.bf16.mxu0 0
    %268 = vmatpush2.bf16.msra.mxu0 0
    %269 = vmatprep.subr.bf16.mxu0 0
    %270 = vmatpush2.bf16.msra.mxu0 0
    %271 = vmatprep.subr.bf16.mxu0 0
    %272 = vmatpush2.bf16.msra.mxu0 0
    %273 = vmatprep.subr.bf16.mxu0 0
    %274 = vmatpush2.bf16.msra.mxu0 0
    %275 = vmatprep.subr.bf16.mxu0 0
    %276 = vmatpush2.bf16.msra.mxu0 0
    %277 = vmatprep.subr.bf16.mxu0 0
    %278 = vmatpush2.bf16.msra.mxu0 0
    %279 = vmatprep.mubr.bf16.mxu0 0
    %280 = vmatmul.mubr.bf16.gmra.mxu0 %v192
    %v281 = vpop.f32.mrf.mxu0
    %v282 = vadd.f32 %v197, %v281
    %v283 = vpop.f32.mrf.mxu0
    %v284 = vpop.f32.mrf.mxu0
    %v285 = vpop.f32.mrf.mxu0
    %286 = vdwg.mxu0
    %287 = vst [vmem:[#allocation8] sm:$0xff] %v282
    // Predicated region
    $region34: #{tpu_custom_call.1} parent=1 // pred_check
      _
    $region35: #{tpu_custom_call.1} parent=1 // pred_check_branch
      %289 = sbr.rel (0) target = $region37
    $region36: #{tpu_custom_call.1} parent=1 // pred_region
      %s291 = ssub.s32 128, 128
      %292 = vsyncadd [#allocation4], %s291
      %s294 = sshll.u32 [#allocation8], 4
      %s295 = int_to_ptr.vmem [resolvable:$true] %s294
      %297 = dma.vmem_to_hbm [thread:$0]  %s295, 128, %s5, [#allocation4]
    $region37: #{tpu_custom_call.1} parent=1 // pred_fallthru
      _
    // Predicated region
    $region38: #{tpu_custom_call.1} parent=1 // pred_check
      _
    $region39: #{tpu_custom_call.1} parent=1 // pred_check_branch
      %299 = sbr.rel (0) target = $region41
    $region40: #{tpu_custom_call.1} parent=1 // pred_region
      %300 = dma.done [#allocation4], 128
    $region41: #{tpu_custom_call.1} parent=1 // pred_fallthru
      _
    %301 = vsyncpa [#allocation3], 1
    %302 = vsyncpa [#allocation6], 1
    %303 = vsyncpa [#allocation4], 1

// kernel: tpu_custom_call.1
$region0: #{tpu_custom_call.1}
  #allocation0 [shape = 'u32[]', space=smem, size = 0x4, offset = 0x4, fixed_abs, tag = 'smem constant byte address 0x4 - core index']
  #allocation1 [shape = 'u32[144,128]{1,0:T(1,128)}', space=vmem, size = 0x12000, scoped, tag = 'internal scratch']
  #allocation2 [shape = 'f32[8,128]{1,0:T(8,128)}', space=vmem, size = 0x1000, scoped, tag = 'scratch operand']
  %s0 = inlined_call_operand.hbm [shape: f32[8,128], index: 0, kind: input, shape index: {}]
  %s1 = inlined_call_operand.hbm [shape: bf16[128,128], index: 1, kind: input, shape index: {}]
  %s2 = inlined_call_operand.vmem [shape: f32[1,128], index: 2, kind: input, shape index: {}]
  %s3 = inlined_call_operand.hbm [shape: f32[8,128], index: 3, kind: output, shape index: {}]
  %s4 = sld [smem:[#allocation0]]
  $region38: #{tpu_custom_call.1} parent=0
    _
  %s6 = ssub.s32 1, %s4
  %s7 = scalar_select 0, %s6, %s4
  $region1: #{tpu_custom_call.1} parent=0
    #allocation3 [shape = 'u8[4096]{0}', space=vmem, size = 0x1000, scoped, tag = 'input window, operand 0, single buffered']
    #allocation4 [shape = 's32[1]{0}', space=sflag, size = 0x4, scoped, tag = 'scoped memory for tpu_custom_call.1']
    #allocation5 [shape = 's32[1]{0}', space=sflag, size = 0x4, scoped, tag = 'scoped memory for tpu_custom_call.1']
    #allocation6 [shape = 'u8[32768]{0}', space=vmem, size = 0x8000, scoped, tag = 'input window, operand 1, single buffered']
    #allocation7 [shape = 's32[1]{0}', space=sflag, size = 0x4, scoped, tag = 'scoped memory for tpu_custom_call.1']
    #allocation8 [shape = 'u8[4096]{0}', space=vmem, size = 0x1000, scoped, tag = 'output window, operand 0, single buffered']
    %8 = vsyncpa [#allocation4], 0
    %9 = vsyncpa [#allocation7], 0
    %10 = vsyncpa [#allocation5], 0
    // Predicated region
    $region2: #{tpu_custom_call.1} parent=1 // pred_check
      _
    $region3: #{tpu_custom_call.1} parent=1 // pred_check_branch
      %12 = sbr.rel (0) target = $region5
    $region4: #{tpu_custom_call.1} parent=1 // pred_region
      %s14 = ssub.s32 128, 128
      %15 = vsyncadd [#allocation4], %s14
      %s17 = sshll.u32 [#allocation3], 4
      %s18 = int_to_ptr.vmem [resolvable:$true] %s17
      %20 = dma.hbm_to_vmem [thread:$0]  %s0, 128, %s18, [#allocation4]
    $region5: #{tpu_custom_call.1} parent=1 // pred_fallthru
      _
    // Predicated region
    $region6: #{tpu_custom_call.1} parent=1 // pred_check
      _
    $region7: #{tpu_custom_call.1} parent=1 // pred_check_branch
      %22 = sbr.rel (0) target = $region9
    $region8: #{tpu_custom_call.1} parent=1 // pred_region
      %s24 = ssub.s32 1024, 1024
      %25 = vsyncadd [#allocation7], %s24
      %s26 = sshll.u32 [#allocation6], 4
      %s27 = int_to_ptr.vmem [resolvable:$true] %s26
      %32 = dma.hbm_to_vmem [thread:$0]  %s1, 1024, %s27, [#allocation7], 64, 64, 4
    $region9: #{tpu_custom_call.1} parent=1 // pred_fallthru
      _
    // Predicated region
    $region10: #{tpu_custom_call.1} parent=1 // pred_check
      _
    $region11: #{tpu_custom_call.1} parent=1 // pred_check_branch
      %34 = sbr.rel (0) target = $region13
    $region12: #{tpu_custom_call.1} parent=1 // pred_region
      _
    $region13: #{tpu_custom_call.1} parent=1 // pred_fallthru
      _
    // Predicated region
    $region14: #{tpu_custom_call.1} parent=1 // pred_check
      _
    $region15: #{tpu_custom_call.1} parent=1 // pred_check_branch
      %36 = sbr.rel (0) target = $region17
    $region16: #{tpu_custom_call.1} parent=1 // pred_region
      %37 = dma.done [#allocation4], 128
    $region17: #{tpu_custom_call.1} parent=1 // pred_fallthru
      _
    // Predicated region
    $region18: #{tpu_custom_call.1} parent=1 // pred_check
      _
    $region19: #{tpu_custom_call.1} parent=1 // pred_check_branch
      %39 = sbr.rel (0) target = $region21
    $region20: #{tpu_custom_call.1} parent=1 // pred_region
      %40 = dma.done [#allocation7], 1024
    $region21: #{tpu_custom_call.1} parent=1 // pred_fallthru
      _
    %p42 = scmp.eq.s32.totalorder 0, 0
    // Predicated region
    $region22: #{tpu_custom_call.1} parent=1 // pred_check
      %p43 = pneg %p42
    $region23: #{tpu_custom_call.1} parent=1 // pred_check_branch
      %45 = sbr.rel (%p43) target = $region25
    $region24: #{tpu_custom_call.1} parent=1 // pred_region
      %46 = vst [vmem:[#allocation2] sm:$0xff] 0.0
    $region25: #{tpu_custom_call.1} parent=1 // pred_fallthru
      _
    %v47 = vld [vmem:[#allocation6] sm:$0xf]
    %v48 = vld [vmem:[#allocation6 + $0x4] sm:$0xf]
    %v49 = vld [vmem:[#allocation6 + $0x8] sm:$0xf]
    %v50 = vld [vmem:[#allocation6 + $0xc] sm:$0xf]
    %v51 = vld [vmem:[#allocation6 + $0x10] sm:$0xf]
    %v52 = vld [vmem:[#allocation6 + $0x14] sm:$0xf]
    %v53 = vld [vmem:[#allocation6 + $0x18] sm:$0xf]
    %v54 = vld [vmem:[#allocation6 + $0x1c] sm:$0xf]
    %v55 = vld [vmem:[#allocation6 + $0x20] sm:$0xf]
    %v56 = vld [vmem:[#allocation6 + $0x24] sm:$0xf]
    %v57 = vld [vmem:[#allocation6 + $0x28] sm:$0xf]
    %v58 = vld [vmem:[#allocation6 + $0x2c] sm:$0xf]
    %v59 = vld [vmem:[#allocation6 + $0x30] sm:$0xf]
    %v60 = vld [vmem:[#allocation6 + $0x34] sm:$0xf]
    %v61 = vld [vmem:[#allocation6 + $0x38] sm:$0xf]
    %v62 = vld [vmem:[#allocation6 + $0x3c] sm:$0xf]
    %v63 = vld [vmem:[#allocation2] sm:$0xff]
    %v64 = vld [vmem:[#allocation3] sm:$0xff]
    %v65 = vpack.c.bf16 %v64, %v64
    %v82 = vunpack.c.l.b16 %v47
    %v83 = vunpack.c.l.b16 %v48
    %v84 = vunpack.c.l.b16 %v49
    %v85 = vunpack.c.l.b16 %v50
    %v86 = vunpack.c.l.b16 %v51
    %v87 = vunpack.c.l.b16 %v52
    %v88 = vunpack.c.l.b16 %v53
    %v89 = vunpack.c.l.b16 %v54
    %v90 = vunpack.c.l.b16 %v55
    %v91 = vunpack.c.l.b16 %v56
    %v92 = vunpack.c.l.b16 %v57
    %v93 = vunpack.c.l.b16 %v58
    %v94 = vunpack.c.l.b16 %v59
    %v95 = vunpack.c.l.b16 %v60
    %v96 = vunpack.c.l.b16 %v61
    %v97 = vunpack.c.l.b16 %v62
    %v98 = vpack.c.b16 %v83, %v82
    %v99 = vpack.c.b16 %v85, %v84
    %v100 = vpack.c.b16 %v87, %v86
    %v101 = vpack.c.b16 %v89, %v88
    %v102 = vpack.c.b16 %v91, %v90
    %v103 = vpack.c.b16 %v93, %v92
    %v104 = vpack.c.b16 %v95, %v94
    %v105 = vpack.c.b16 %v97, %v96
    %114 = vmatprep.subr.bf16.mxu0 0
    %115 = vmatpush1.bf16.msra.mxu0 %v105
    %116 = vmatprep.subr.bf16.mxu0 0
    %117 = vmatpush1.bf16.msra.mxu0 %v104
    %118 = vmatprep.subr.bf16.mxu0 0
    %119 = vmatpush1.bf16.msra.mxu0 %v103
    %120 = vmatprep.subr.bf16.mxu0 0
    %121 = vmatpush1.bf16.msra.mxu0 %v102
    %122 = vmatprep.subr.bf16.mxu0 0
    %123 = vmatpush1.bf16.msra.mxu0 %v101
    %124 = vmatprep.subr.bf16.mxu0 0
    %125 = vmatpush1.bf16.msra.mxu0 %v100
    %126 = vmatprep.subr.bf16.mxu0 0
    %127 = vmatpush1.bf16.msra.mxu0 %v99
    %128 = vmatprep.subr.bf16.mxu0 0
    %129 = vmatpush1.bf16.msra.mxu0 %v98
    %130 = vmatprep.subr.bf16.mxu0 0
    %131 = vmatpush2.bf16.msra.mxu0 0
    %132 = vmatprep.subr.bf16.mxu0 0
    %133 = vmatpush2.bf16.msra.mxu0 0
    %134 = vmatprep.subr.bf16.mxu0 0
    %135 = vmatpush2.bf16.msra.mxu0 0
    %136 = vmatprep.subr.bf16.mxu0 0
    %137 = vmatpush2.bf16.msra.mxu0 0
    %138 = vmatprep.subr.bf16.mxu0 0
    %139 = vmatpush2.bf16.msra.mxu0 0
    %140 = vmatprep.subr.bf16.mxu0 0
    %141 = vmatpush2.bf16.msra.mxu0 0
    %142 = vmatprep.subr.bf16.mxu0 0
    %143 = vmatpush2.bf16.msra.mxu0 0
    %144 = vmatprep.subr.bf16.mxu0 0
    %145 = vmatpush2.bf16.msra.mxu0 0
    %146 = vmatprep.mubr.bf16.mxu0 0
    %147 = vmatmul.mubr.bf16.gmra.mxu0 %v65
    %v148 = vpop.f32.mrf.mxu0
    %v149 = vadd.f32 0.0, %v148
    %v150 = vpop.f32.mrf.mxu0
    %v151 = vpop.f32.mrf.mxu0
    %v152 = vpop.f32.mrf.mxu0
    %153 = vdwg.mxu0
    %v154 = vadd.f32 %v63, %v149
    %155 = vst [vmem:[#allocation2] sm:$0xff] %v154
    // Predicated region
    $region26: #{tpu_custom_call.1} parent=1 // pred_check
      %p156 = pneg %p42
    $region27: #{tpu_custom_call.1} parent=1 // pred_check_branch
      %158 = sbr.rel (%p156) target = $region29
    $region28: #{tpu_custom_call.1} parent=1 // pred_region
      %v159 = vld [vmem:[#allocation2] sm:$0xff]
      %v160 = vld [vmem:[%s2] sm:$0x1]
      %v162 = vlaneseq
      %v163 = vshrl.u32 %v162, 7
      %v164 = vsub.s32 0, %v163
      %v165 = vrot.slane %v160, %v164
      %v167 = vadd.f32 %v159, %v165
      %v168 = vmax.f32 %v167, 0.0
      %169 = vst [vmem:[#allocation8] sm:$0xff] %v168
    $region29: #{tpu_custom_call.1} parent=1 // pred_fallthru
      _
    // Predicated region
    $region30: #{tpu_custom_call.1} parent=1 // pred_check
      _
    $region31: #{tpu_custom_call.1} parent=1 // pred_check_branch
      %171 = sbr.rel (0) target = $region33
    $region32: #{tpu_custom_call.1} parent=1 // pred_region
      %s173 = ssub.s32 128, 128
      %174 = vsyncadd [#allocation5], %s173
      %s176 = sshll.u32 [#allocation8], 4
      %s177 = int_to_ptr.vmem [resolvable:$true] %s176
      %179 = dma.vmem_to_hbm [thread:$0]  %s177, 128, %s3, [#allocation5]
    $region33: #{tpu_custom_call.1} parent=1 // pred_fallthru
      _
    // Predicated region
    $region34: #{tpu_custom_call.1} parent=1 // pred_check
      _
    $region35: #{tpu_custom_call.1} parent=1 // pred_check_branch
      %181 = sbr.rel (0) target = $region37
    $region36: #{tpu_custom_call.1} parent=1 // pred_region
      %182 = dma.done [#allocation5], 128
    $region37: #{tpu_custom_call.1} parent=1 // pred_fallthru
      _
    %183 = vsyncpa [#allocation4], 1
    %184 = vsyncpa [#allocation7], 1
    %185 = vsyncpa [#allocation5], 1

</llo_original>
